<compile_context>
chip_gen: v5e
topology: v5e:2x2
jax: 0.10.0
libtpu: 0.0.40
codegen_flags: <defaults>
</compile_context>

<pallas_src>
import jax
import jax.numpy as jnp
from jax import lax
from jax.experimental import pallas as pl
from jax.experimental.pallas import tpu as pltpu

EPS = 1e-6


def decoder_kernel(x_ref, w_ref, b_ref, ga_ref, gb_ref, o_ref):
    # x_ref : (TR, F)   bf16  row tile of the flattened (batch*seq, F) input
    # w_ref : (Nl, F, F) bf16 per-layer folded weights   diag(a2_l) @ W_l
    # b_ref : (Nl, F)    f32  per-layer folded biases    b2_l @ W_l + b_l
    # ga_ref/gb_ref : (1, F) f32  final-LayerNorm gain / bias
    x = x_ref[...].astype(jnp.float32)
    f = x.shape[-1]
    n_layers = w_ref.shape[0]
    inv_nm1 = 1.0 / (f - 1)

    def _center_scale(v):
        # torch.std semantics: unbiased (N-1) variance, eps added to std.
        mean = jnp.mean(v, axis=-1, keepdims=True)
        c = v - mean
        var_unb = jnp.sum(c * c, axis=-1, keepdims=True) * inv_nm1
        inv = pl.reciprocal(jnp.sqrt(var_unb) + EPS, approx=True)  # EUP slot
        return c * inv

    def layer_step(n, h):
        normed = _center_scale(h)
        z = jnp.dot(normed.astype(jnp.bfloat16), w_ref[n],
                    preferred_element_type=jnp.float32)   # bf16 in, f32 acc (MXU)
        return h + z + b_ref[pl.ds(n, 1), :]              # residual (+ folded bias)

    if n_layers <= 4:
        # Small N: static unroll lets the scheduler interleave across layers.
        for n in range(n_layers):
            x = layer_step(n, x)
    else:
        # Large N: bound live ranges per iteration (matmul latency dominates).
        x = lax.fori_loop(0, n_layers, layer_step, x)

    # Final LayerNorm (Decoder.norm).  Exact reciprocal: runs once, and its
    # error is not absorbed by a residual stream.
    mean = jnp.mean(x, axis=-1, keepdims=True)
    c = x - mean
    var_unb = jnp.sum(c * c, axis=-1, keepdims=True) * inv_nm1
    inv = 1.0 / (jnp.sqrt(var_unb) + EPS)
    o_ref[...] = (ga_ref[...] * (c * inv) + gb_ref[...]).astype(o_ref.dtype)


def _round_up(x, m):
    return (x + m - 1) // m * m


def _const_spec(shape):
    """BlockSpec for a grid-invariant block; single-buffered when supported."""
    index_map = lambda i: (0,) * len(shape)
    try:
        return pl.BlockSpec(shape, index_map, pipeline_mode=pl.Buffered(1))
    except Exception:  # older jax without pipeline_mode / Buffered(1)
        return pl.BlockSpec(shape, index_map)


def decoder_forward(x, layer_w, layer_b, layer_a2, layer_b2, norm_a2, norm_b2,
                    *, tile_rows=256):
    """x: (batch, seq, F). layer_*: stacked per-layer params, leading dim = N layers."""
    B, S, F = x.shape
    Nl = layer_w.shape[0]
    R = B * S

    # Fold per-layer LayerNorm gain/bias into the Linear layer (host side, once):
    #   (a2*c*inv + b2) @ W + b  ==  (c*inv) @ (diag(a2) W) + (b2 @ W + b)
    w_folded = (layer_a2[:, :, None].astype(jnp.float32)
                * layer_w.astype(jnp.float32)).astype(jnp.bfloat16)       # (Nl,F,F)
    b_folded = (jnp.einsum("nf,nfg->ng", layer_b2.astype(jnp.float32),
                           layer_w.astype(jnp.float32))
                + layer_b.astype(jnp.float32))                            # (Nl,F) lane-dense

    ga = norm_a2.reshape(1, F).astype(jnp.float32)
    gb = norm_b2.reshape(1, F).astype(jnp.float32)

    # Row tiling: MXU-matched tiles, adapted to (a) avoid pathological padding
    # when R is just above a tile boundary and (b) give the "parallel" row axis
    # >=2 grid steps whenever there is more than one tile of rows (v7x megacore).
    r8 = _round_up(R, 8)
    tr = min(tile_rows, r8)
    if r8 > tr:
        n_tiles = max(2, pl.cdiv(r8, tr))
        tr = _round_up(pl.cdiv(r8, n_tiles), 8)
    r_pad = _round_up(r8, tr)
    grid = (r_pad // tr,)

    # Stream activations in bf16 (halves HBM traffic & pipeline buffers); the
    # kernel promotes to f32 and carries the residual stream in f32.
    x2d = x.reshape(R, F).astype(jnp.bfloat16)
    if r_pad != R:
        x2d = jnp.pad(x2d, ((0, r_pad - R), (0, 0)))   # zero rows are LN-safe

    # VMEM budget: bf16 double-buffered row tiles + single-buffered resident
    # params + headroom for f32 in-kernel temporaries (x, c, normed, z).
    est_vmem = (2 * 2 * tr * F * 2          # x / out tiles (bf16, 2 buffers each)
                + Nl * F * F * 2            # bf16 folded weights (Buffered(1))
                + Nl * F * 4                # folded biases
                + 2 * F * 4                 # final-norm gain / bias
                + 4 * tr * F * 4)           # f32 temporaries inside the kernel
    try:  # generation-aware cap: ~109 MiB on v5e/v6e (128 MiB), ~54 MiB on v7x (64 MiB)
        vmem_phys = pltpu.get_tpu_info().vmem_capacity_bytes
    except Exception:
        vmem_phys = 64 * 1024 * 1024
    vmem_cap = int(0.85 * vmem_phys)
    vmem_limit = int(min(max(2 * est_vmem, 32 * 1024 * 1024), vmem_cap))

    cost = pl.CostEstimate(
        flops=2 * r_pad * F * F * Nl,
        transcendentals=2 * r_pad * (Nl + 1),          # sqrt + reciprocal per norm
        bytes_accessed=(2 * r_pad * F * 2              # bf16 activations in + out
                        + Nl * F * F * 2 + Nl * F * 4 + 2 * F * 4),
    )

    out2d = pl.pallas_call(
        decoder_kernel,
        out_shape=jax.ShapeDtypeStruct((r_pad, F), jnp.bfloat16),
        grid_spec=pltpu.PrefetchScalarGridSpec(
            num_scalar_prefetch=0,
            grid=grid,
            in_specs=[
                pl.BlockSpec((tr, F), lambda i: (i, 0)),   # activation row tile
                _const_spec((Nl, F, F)),                   # folded weights (resident)
                _const_spec((Nl, F)),                      # folded biases  (resident)
                _const_spec((1, F)),                       # final-norm gain
                _const_spec((1, F)),                       # final-norm bias
            ],
            out_specs=pl.BlockSpec((tr, F), lambda i: (i, 0)),
        ),
        compiler_params=pltpu.CompilerParams(
            dimension_semantics=("parallel",),
            vmem_limit_bytes=vmem_limit,
        ),
        cost_estimate=cost,
    )(x2d, w_folded, b_folded, ga, gb)

    return out2d[:R].reshape(B, S, F).astype(x.dtype)


def reference(x, layer_w, layer_b, layer_a2, layer_b2, norm_a2, norm_b2):
    """Pure-JAX f32 reference mirroring the PyTorch Decoder forward (eval mode)."""
    def ln(v, a, b):
        mean = jnp.mean(v, axis=-1, keepdims=True)
        c = v - mean
        std = jnp.sqrt(jnp.sum(c * c, axis=-1, keepdims=True) / (v.shape[-1] - 1))
        return a * c / (std + EPS) + b

    h = x.astype(jnp.float32)
    for n in range(layer_w.shape[0]):
        z = ln(h, layer_a2[n], layer_b2[n]) @ layer_w[n] + layer_b[n]
        h = h + z                                  # dropout is identity in eval
    return ln(h, norm_a2, norm_b2).astype(x.dtype)


if __name__ == "__main__":
    key = jax.random.PRNGKey(0)
    B, S, F, NL = 2, 8, 128, 2   # batch=2, seq=8, hidden=128, N=2 decoder layers

    kx, kw, kb, ka, kb2, kna, knb = jax.random.split(key, 7)
    x = jax.random.normal(kx, (B, S, F), dtype=jnp.float32)

    # Per-layer sublayer (Linear F->F) parameters + per-layer LayerNorm params.
    layer_w = jax.random.normal(kw, (NL, F, F), dtype=jnp.float32) * 0.02
    layer_b = jax.random.normal(kb, (NL, F), dtype=jnp.float32) * 0.02
    layer_a2 = 1.0 + 0.1 * jax.random.normal(ka, (NL, F), dtype=jnp.float32)
    layer_b2 = 0.1 * jax.random.normal(kb2, (NL, F), dtype=jnp.float32)

    # Final LayerNorm parameters (Decoder.norm).
    norm_a2 = 1.0 + 0.1 * jax.random.normal(kna, (F,), dtype=jnp.float32)
    norm_b2 = 0.1 * jax.random.normal(knb, (F,), dtype=jnp.float32)

    out = decoder_forward(x, layer_w, layer_b, layer_a2, layer_b2,
                          norm_a2, norm_b2)
    out = jax.block_until_ready(out)

    ref = reference(x, layer_w, layer_b, layer_a2, layer_b2, norm_a2, norm_b2)
    assert out.shape == x.shape and out.dtype == x.dtype
    # bf16 activation streaming + bf16 MXU matmuls (f32 acc) + approx reciprocal
    # inside the layer loop -> slightly looser tolerance than pure f32.
    assert jnp.allclose(out, ref, atol=2.5e-2, rtol=2.5e-2), "mismatch vs reference"

    print("KERNEL_OK")
</pallas_src>

<mosaic_0001>
module attributes {stable_mosaic.version = 11 : i64} {
  func.func @decoder_kernel(%arg0: i32, %arg1: memref<16x128xbf16, #tpu.memory_space<vmem>>, %arg2: memref<2x128x128xbf16, #tpu.memory_space<vmem>>, %arg3: memref<2x128xf32, #tpu.memory_space<vmem>>, %arg4: memref<1x128xf32, #tpu.memory_space<vmem>>, %arg5: memref<1x128xf32, #tpu.memory_space<vmem>>, %arg6: memref<16x128xbf16, #tpu.memory_space<vmem>>) attributes {dimension_semantics = [#tpu.dimension_semantics<parallel>], iteration_bounds = array<i64: 1>, scalar_prefetch = 0 : i64, scratch_operands = 0 : i64, tpu.core_type = #tpu.core_type<tc>, window_params = [{transform_indices = @transform_0, window_bounds = array<i64: 16, 128>}, {pipeline_mode = #tpu.pipeline_mode<synchronous>, transform_indices = @transform_1, window_bounds = array<i64: 2, 128, 128>}, {pipeline_mode = #tpu.pipeline_mode<synchronous>, transform_indices = @transform_2, window_bounds = array<i64: 2, 128>}, {pipeline_mode = #tpu.pipeline_mode<synchronous>, transform_indices = @transform_3, window_bounds = array<i64: 1, 128>}, {pipeline_mode = #tpu.pipeline_mode<synchronous>, transform_indices = @transform_4, window_bounds = array<i64: 1, 128>}, {transform_indices = @transform_5, window_bounds = array<i64: 16, 128>}]} {
    %c0 = arith.constant 0 : index
    %c0_0 = arith.constant 0 : index
    %0 = vector.load %arg1[%c0, %c0_0] : memref<16x128xbf16, #tpu.memory_space<vmem>>, vector<16x128xbf16>
    %1 = arith.extf %0 : vector<16x128xbf16> to vector<16x128xf32>
    %cst = arith.constant dense<0.000000e+00> : vector<16xf32>
    %2 = vector.multi_reduction <add>, %1, %cst [1] : vector<16x128xf32> to vector<16xf32>
    %3 = vector.shape_cast %2 : vector<16xf32> to vector<16x1xf32>
    %cst_1 = arith.constant 1.280000e+02 : f32
    %4 = vector.broadcast %cst_1 : f32 to vector<16x1xf32>
    %5 = arith.divf %3, %4 : vector<16x1xf32>
    %6 = vector.broadcast %5 : vector<16x1xf32> to vector<16x128xf32>
    %7 = arith.subf %1, %6 : vector<16x128xf32>
    %8 = arith.mulf %7, %7 : vector<16x128xf32>
    %cst_2 = arith.constant dense<0.000000e+00> : vector<16xf32>
    %9 = vector.multi_reduction <add>, %8, %cst_2 [1] : vector<16x128xf32> to vector<16xf32>
    %10 = vector.shape_cast %9 : vector<16xf32> to vector<16x1xf32>
    %cst_3 = arith.constant 0.00787401571 : f32
    %11 = vector.broadcast %cst_3 : f32 to vector<16x1xf32>
    %12 = arith.mulf %10, %11 : vector<16x1xf32>
    %13 = math.sqrt %12 : vector<16x1xf32>
    %cst_4 = arith.constant 9.99999997E-7 : f32
    %14 = vector.broadcast %cst_4 : f32 to vector<16x1xf32>
    %15 = arith.addf %13, %14 : vector<16x1xf32>
    %16 = tpu.reciprocal %15 {approx = true} : vector<16x1xf32> -> vector<16x1xf32>
    %17 = vector.broadcast %16 : vector<16x1xf32> to vector<16x128xf32>
    %18 = arith.mulf %7, %17 : vector<16x128xf32>
    %19 = arith.truncf %18 : vector<16x128xf32> to vector<16x128xbf16>
    %c0_5 = arith.constant 0 : index
    %c0_6 = arith.constant 0 : index
    %c0_7 = arith.constant 0 : index
    %20 = vector.load %arg2[%c0_5, %c0_6, %c0_7] : memref<2x128x128xbf16, #tpu.memory_space<vmem>>, vector<1x128x128xbf16>
    %21 = vector.shape_cast %20 : vector<1x128x128xbf16> to vector<128x128xbf16>
    %cst_8 = arith.constant dense<0.000000e+00> : vector<16x128xf32>
    %22 = tpu.matmul %19, %21, %cst_8 {dimension_numbers = #tpu.dot_dimension_numbers<[1], [0], [0], [1], [0, 0, 1, 1], [], []>} : vector<16x128xbf16>, vector<128x128xbf16>, vector<16x128xf32> -> vector<16x128xf32>
    %23 = arith.addf %1, %22 : vector<16x128xf32>
    %c0_9 = arith.constant 0 : index
    %c0_10 = arith.constant 0 : index
    %24 = vector.load %arg3[%c0_9, %c0_10] : memref<2x128xf32, #tpu.memory_space<vmem>>, vector<1x128xf32>
    %25 = vector.broadcast %24 : vector<1x128xf32> to vector<16x128xf32>
    %26 = arith.addf %23, %25 : vector<16x128xf32>
    %cst_11 = arith.constant dense<0.000000e+00> : vector<16xf32>
    %27 = vector.multi_reduction <add>, %26, %cst_11 [1] : vector<16x128xf32> to vector<16xf32>
    %28 = vector.shape_cast %27 : vector<16xf32> to vector<16x1xf32>
    %cst_12 = arith.constant 1.280000e+02 : f32
    %29 = vector.broadcast %cst_12 : f32 to vector<16x1xf32>
    %30 = arith.divf %28, %29 : vector<16x1xf32>
    %31 = vector.broadcast %30 : vector<16x1xf32> to vector<16x128xf32>
    %32 = arith.subf %26, %31 : vector<16x128xf32>
    %33 = arith.mulf %32, %32 : vector<16x128xf32>
    %cst_13 = arith.constant dense<0.000000e+00> : vector<16xf32>
    %34 = vector.multi_reduction <add>, %33, %cst_13 [1] : vector<16x128xf32> to vector<16xf32>
    %35 = vector.shape_cast %34 : vector<16xf32> to vector<16x1xf32>
    %cst_14 = arith.constant 0.00787401571 : f32
    %36 = vector.broadcast %cst_14 : f32 to vector<16x1xf32>
    %37 = arith.mulf %35, %36 : vector<16x1xf32>
    %38 = math.sqrt %37 : vector<16x1xf32>
    %cst_15 = arith.constant 9.99999997E-7 : f32
    %39 = vector.broadcast %cst_15 : f32 to vector<16x1xf32>
    %40 = arith.addf %38, %39 : vector<16x1xf32>
    %41 = tpu.reciprocal %40 {approx = true} : vector<16x1xf32> -> vector<16x1xf32>
    %42 = vector.broadcast %41 : vector<16x1xf32> to vector<16x128xf32>
    %43 = arith.mulf %32, %42 : vector<16x128xf32>
    %44 = arith.truncf %43 : vector<16x128xf32> to vector<16x128xbf16>
    %c1 = arith.constant 1 : index
    %c0_16 = arith.constant 0 : index
    %c0_17 = arith.constant 0 : index
    %45 = vector.load %arg2[%c1, %c0_16, %c0_17] : memref<2x128x128xbf16, #tpu.memory_space<vmem>>, vector<1x128x128xbf16>
    %46 = vector.shape_cast %45 : vector<1x128x128xbf16> to vector<128x128xbf16>
    %cst_18 = arith.constant dense<0.000000e+00> : vector<16x128xf32>
    %47 = tpu.matmul %44, %46, %cst_18 {dimension_numbers = #tpu.dot_dimension_numbers<[1], [0], [0], [1], [0, 0, 1, 1], [], []>} : vector<16x128xbf16>, vector<128x128xbf16>, vector<16x128xf32> -> vector<16x128xf32>
    %48 = arith.addf %26, %47 : vector<16x128xf32>
    %c1_19 = arith.constant 1 : index
    %c0_20 = arith.constant 0 : index
    %49 = vector.load %arg3[%c1_19, %c0_20] : memref<2x128xf32, #tpu.memory_space<vmem>>, vector<1x128xf32>
    %50 = vector.broadcast %49 : vector<1x128xf32> to vector<16x128xf32>
    %51 = arith.addf %48, %50 : vector<16x128xf32>
    %cst_21 = arith.constant dense<0.000000e+00> : vector<16xf32>
    %52 = vector.multi_reduction <add>, %51, %cst_21 [1] : vector<16x128xf32> to vector<16xf32>
    %53 = vector.shape_cast %52 : vector<16xf32> to vector<16x1xf32>
    %cst_22 = arith.constant 1.280000e+02 : f32
    %54 = vector.broadcast %cst_22 : f32 to vector<16x1xf32>
    %55 = arith.divf %53, %54 : vector<16x1xf32>
    %56 = vector.broadcast %55 : vector<16x1xf32> to vector<16x128xf32>
    %57 = arith.subf %51, %56 : vector<16x128xf32>
    %58 = arith.mulf %57, %57 : vector<16x128xf32>
    %cst_23 = arith.constant dense<0.000000e+00> : vector<16xf32>
    %59 = vector.multi_reduction <add>, %58, %cst_23 [1] : vector<16x128xf32> to vector<16xf32>
    %60 = vector.shape_cast %59 : vector<16xf32> to vector<16x1xf32>
    %cst_24 = arith.constant 0.00787401571 : f32
    %61 = vector.broadcast %cst_24 : f32 to vector<16x1xf32>
    %62 = arith.mulf %60, %61 : vector<16x1xf32>
    %63 = math.sqrt %62 : vector<16x1xf32>
    %cst_25 = arith.constant 9.99999997E-7 : f32
    %64 = vector.broadcast %cst_25 : f32 to vector<16x1xf32>
    %65 = arith.addf %63, %64 : vector<16x1xf32>
    %cst_26 = arith.constant 1.000000e+00 : f32
    %66 = vector.broadcast %cst_26 : f32 to vector<16x1xf32>
    %67 = arith.divf %66, %65 : vector<16x1xf32>
    %c0_27 = arith.constant 0 : index
    %c0_28 = arith.constant 0 : index
    %68 = vector.load %arg4[%c0_27, %c0_28] : memref<1x128xf32, #tpu.memory_space<vmem>>, vector<1x128xf32>
    %69 = vector.broadcast %67 : vector<16x1xf32> to vector<16x128xf32>
    %70 = arith.mulf %57, %69 : vector<16x128xf32>
    %71 = vector.broadcast %68 : vector<1x128xf32> to vector<16x128xf32>
    %72 = arith.mulf %71, %70 : vector<16x128xf32>
    %c0_29 = arith.constant 0 : index
    %c0_30 = arith.constant 0 : index
    %73 = vector.load %arg5[%c0_29, %c0_30] : memref<1x128xf32, #tpu.memory_space<vmem>>, vector<1x128xf32>
    %74 = vector.broadcast %73 : vector<1x128xf32> to vector<16x128xf32>
    %75 = arith.addf %72, %74 : vector<16x128xf32>
    %76 = arith.truncf %75 : vector<16x128xf32> to vector<16x128xbf16>
    %c0_31 = arith.constant 0 : index
    %c0_32 = arith.constant 0 : index
    %77 = vector.load %arg6[%c0_31, %c0_32] : memref<16x128xbf16, #tpu.memory_space<vmem>>, vector<16x128xbf16>
    tpu.vector_store %arg6[%c0_31, %c0_32], %76 {strides = array<i32>} : memref<16x128xbf16, #tpu.memory_space<vmem>>, vector<16x128xbf16>,
    return
  }
  func.func @transform_0(%arg0: i32) -> (i32, i32) {
    %c0_i32 = arith.constant 0 : i32
    %c0_i32_0 = arith.constant 0 : i32
    return %arg0, %c0_i32 : i32, i32
  }
  func.func @transform_1(%arg0: i32) -> (i32, i32, i32) {
    %c0_i32 = arith.constant 0 : i32
    %c0_i32_0 = arith.constant 0 : i32
    %c0_i32_1 = arith.constant 0 : i32
    %c0_i32_2 = arith.constant 0 : i32
    return %c0_i32, %c0_i32_0, %c0_i32_1 : i32, i32, i32
  }
  func.func @transform_2(%arg0: i32) -> (i32, i32) {
    %c0_i32 = arith.constant 0 : i32
    %c0_i32_0 = arith.constant 0 : i32
    %c0_i32_1 = arith.constant 0 : i32
    return %c0_i32, %c0_i32_0 : i32, i32
  }
  func.func @transform_3(%arg0: i32) -> (i32, i32) {
    %c0_i32 = arith.constant 0 : i32
    %c0_i32_0 = arith.constant 0 : i32
    %c0_i32_1 = arith.constant 0 : i32
    return %c0_i32, %c0_i32_0 : i32, i32
  }
  func.func @transform_4(%arg0: i32) -> (i32, i32) {
    %c0_i32 = arith.constant 0 : i32
    %c0_i32_0 = arith.constant 0 : i32
    %c0_i32_1 = arith.constant 0 : i32
    return %c0_i32, %c0_i32_0 : i32, i32
  }
  func.func @transform_5(%arg0: i32) -> (i32, i32) {
    %c0_i32 = arith.constant 0 : i32
    %c0_i32_0 = arith.constant 0 : i32
    return %arg0, %c0_i32 : i32, i32
  }
}

</mosaic_0001>

<llo_original>
// kernel: tpu_custom_call.1
$region0: #{tpu_custom_call.1}
  #allocation0 [shape = 'u32[]', space=smem, size = 0x4, offset = 0x4, fixed_abs, tag = 'smem constant byte address 0x4 - core index']
  #allocation1 [shape = 'u32[72,128]{1,0:T(1,128)}', space=vmem, size = 0x9000, scoped, tag = 'internal scratch']
  %s0 = inlined_call_operand.hbm [shape: bf16[16,128], index: 0, kind: input, shape index: {}]
  %s1 = inlined_call_operand.hbm [shape: bf16[2,128,128], index: 1, kind: input, shape index: {}]
  %s2 = inlined_call_operand.hbm [shape: f32[2,128], index: 2, kind: input, shape index: {}]
  %s3 = inlined_call_operand.vmem [shape: f32[1,128], index: 3, kind: input, shape index: {}]
  %s4 = inlined_call_operand.vmem [shape: f32[1,128], index: 4, kind: input, shape index: {}]
  %s5 = inlined_call_operand.hbm [shape: bf16[16,128], index: 5, kind: output, shape index: {}]
  %s6 = sld [smem:[#allocation0]]
  $region42: #{tpu_custom_call.1} parent=0
    _
  %s8 = ssub.s32 1, %s6
  %s9 = scalar_select 0, %s8, %s6
  $region1: #{tpu_custom_call.1} parent=0
    #allocation2 [shape = 'u8[4096]{0}', space=vmem, size = 0x1000, scoped, tag = 'input window, operand 0, single buffered']
    #allocation3 [shape = 's32[1]{0}', space=sflag, size = 0x4, scoped, tag = 'scoped memory for tpu_custom_call.1']
    #allocation4 [shape = 's32[1]{0}', space=sflag, size = 0x4, scoped, tag = 'scoped memory for tpu_custom_call.1']
    #allocation5 [shape = 'u8[65536]{0}', space=vmem, size = 0x10000, scoped, tag = 'input window, operand 1, single buffered']
    #allocation6 [shape = 's32[1]{0}', space=sflag, size = 0x4, scoped, tag = 'scoped memory for tpu_custom_call.1']
    #allocation7 [shape = 'u8[1024]{0}', space=vmem, size = 0x400, scoped, tag = 'input window, operand 2, single buffered']
    #allocation8 [shape = 'u8[4096]{0}', space=vmem, size = 0x1000, scoped, tag = 'output window, operand 0, single buffered']
    %10 = vsyncpa [#allocation3], 0
    %11 = vsyncpa [#allocation6], 0
    %12 = vsyncpa [#allocation4], 0
    // Predicated region
    $region2: #{tpu_custom_call.1} parent=1 // pred_check
      _
    $region3: #{tpu_custom_call.1} parent=1 // pred_check_branch
      %14 = sbr.rel (0) target = $region5
    $region4: #{tpu_custom_call.1} parent=1 // pred_region
      %16 = vsyncadd [#allocation3], 0
      %s17 = sshll.u32 %s0, 4
      %s18 = int_to_ptr.hbm [resolvable:$true] %s17
      %s19 = sshll.u32 [#allocation2], 4
      %s20 = int_to_ptr.vmem [resolvable:$true] %s19
      %25 = dma.hbm_to_vmem [thread:$0]  %s18, 128, %s20, [#allocation3], 64, 64, 4
    $region5: #{tpu_custom_call.1} parent=1 // pred_fallthru
      _
    // Predicated region
    $region6: #{tpu_custom_call.1} parent=1 // pred_check
      _
    $region7: #{tpu_custom_call.1} parent=1 // pred_check_branch
      %27 = sbr.rel (0) target = $region9
    $region8: #{tpu_custom_call.1} parent=1 // pred_region
      %29 = vsyncadd [#allocation6], 0
      %s30 = sshll.u32 %s1, 4
      %s31 = int_to_ptr.hbm [resolvable:$true] %s30
      %s32 = sshll.u32 [#allocation5], 4
      %s33 = int_to_ptr.vmem [resolvable:$true] %s32
      %38 = dma.hbm_to_vmem [thread:$0]  %s31, 2048, %s33, [#allocation6], 64, 64, 4
    $region9: #{tpu_custom_call.1} parent=1 // pred_fallthru
      _
    // Predicated region
    $region10: #{tpu_custom_call.1} parent=1 // pred_check
      _
    $region11: #{tpu_custom_call.1} parent=1 // pred_check_branch
      %40 = sbr.rel (0) target = $region13
    $region12: #{tpu_custom_call.1} parent=1 // pred_region
      %42 = vsyncadd [#allocation6], 0
      %s44 = sshll.u32 %s2, 4
      %s45 = int_to_ptr.hbm [resolvable:$true] %s44
      %s46 = sshll.u32 [#allocation7], 4
      %s47 = int_to_ptr.vmem [resolvable:$true] %s46
      %49 = dma.hbm_to_vmem [thread:$0]  %s45, 32, %s47, [#allocation6]
    $region13: #{tpu_custom_call.1} parent=1 // pred_fallthru
      _
    // Predicated region
    $region14: #{tpu_custom_call.1} parent=1 // pred_check
      _
    $region15: #{tpu_custom_call.1} parent=1 // pred_check_branch
      %51 = sbr.rel (0) target = $region17
    $region16: #{tpu_custom_call.1} parent=1 // pred_region
      _
    $region17: #{tpu_custom_call.1} parent=1 // pred_fallthru
      _
    // Predicated region
    $region18: #{tpu_custom_call.1} parent=1 // pred_check
      _
    $region19: #{tpu_custom_call.1} parent=1 // pred_check_branch
      %53 = sbr.rel (0) target = $region21
    $region20: #{tpu_custom_call.1} parent=1 // pred_region
      _
    $region21: #{tpu_custom_call.1} parent=1 // pred_fallthru
      _
    // Predicated region
    $region22: #{tpu_custom_call.1} parent=1 // pred_check
      _
    $region23: #{tpu_custom_call.1} parent=1 // pred_check_branch
      %55 = sbr.rel (0) target = $region25
    $region24: #{tpu_custom_call.1} parent=1 // pred_region
      %57 = dma.done [#allocation3], 128
    $region25: #{tpu_custom_call.1} parent=1 // pred_fallthru
      _
    // Predicated region
    $region26: #{tpu_custom_call.1} parent=1 // pred_check
      _
    $region27: #{tpu_custom_call.1} parent=1 // pred_check_branch
      %59 = sbr.rel (0) target = $region29
    $region28: #{tpu_custom_call.1} parent=1 // pred_region
      %61 = dma.done [#allocation6], 2048
    $region29: #{tpu_custom_call.1} parent=1 // pred_fallthru
      _
    // Predicated region
    $region30: #{tpu_custom_call.1} parent=1 // pred_check
      _
    $region31: #{tpu_custom_call.1} parent=1 // pred_check_branch
      %63 = sbr.rel (0) target = $region33
    $region32: #{tpu_custom_call.1} parent=1 // pred_region
      %65 = dma.done [#allocation6], 32
    $region33: #{tpu_custom_call.1} parent=1 // pred_fallthru
      _
    %v66 = vld [vmem:[#allocation2] sm:$0xf]
    %v67 = vld [vmem:[#allocation2 + $0x4] sm:$0xf]
    %v68 = vunpack.c.l.bf16 %v66
    %v69 = vunpack.c.l.bf16 %v67
    %70 = vadd.xlane.f32.xlu0 %v68
    %v71 = vpop.xlane.xlu0 %70
    %72 = vadd.xlane.f32.xlu0 %v69
    %v73 = vpop.xlane.xlu0 %72
    %v74 = vrcp.pop 128.0
    %v75 = vmul.f32 128.0, %v74
    %v76 = vsub.f32 1.0, %v75
    %v77 = vmul.f32 %v74, %v76
    %v78 = vadd.f32 %v74, %v77
    %vm79 = vweird.f32 %v74
    %v80 = vsel %vm79, %v74, %v78
    %v81 = vmul.f32 %v71, %v80
    %v82 = vmul.f32 %v73, %v80
    %v83 = vsub.f32 %v68, %v81
    %v84 = vsub.f32 %v69, %v82
    %v85 = vmul.f32 %v83, %v83
    %v86 = vmul.f32 %v84, %v84
    %87 = vadd.xlane.f32.xlu0 %v85
    %v88 = vpop.xlane.xlu0 %87
    %89 = vadd.xlane.f32.xlu0 %v86
    %v90 = vpop.xlane.xlu0 %89
    %v91 = vmul.f32 %v88, 0.007874016
    %v92 = vmul.f32 %v90, 0.007874016
    %v93 = vrsqrt.pop %v91
    %v94 = vmul.f32 %v93, %v91
    %v95 = vmul.f32 %v94, %v93
    %v96 = vmul.f32 0.5, %v95
    %v97 = vsub.f32 1.5, %v96
    %v98 = vmul.f32 %v93, %v97
    %v99 = vmul.f32 %v91, %v98
    %vm100 = vcmp.eq.f32.partialorder %v91, inf
    %v101 = vsel %vm100, %v91, %v99
    %vm102 = vcmp.eq.f32.partialorder %v91, 0.0
    %v103 = vand.u32 %v91, 2147483648
    %v104 = vsel %vm102, %v103, %v101
    %v105 = vrsqrt.pop %v92
    %v106 = vmul.f32 %v105, %v92
    %v107 = vmul.f32 %v106, %v105
    %v108 = vmul.f32 0.5, %v107
    %v109 = vsub.f32 1.5, %v108
    %v110 = vmul.f32 %v105, %v109
    %v111 = vmul.f32 %v92, %v110
    %vm112 = vcmp.eq.f32.partialorder %v92, inf
    %v113 = vsel %vm112, %v92, %v111
    %vm114 = vcmp.eq.f32.partialorder %v92, 0.0
    %v115 = vand.u32 %v92, 2147483648
    %v116 = vsel %vm114, %v115, %v113
    %v117 = vadd.f32 %v104, 1e-06
    %v118 = vadd.f32 %v116, 1e-06
    %v119 = vrcp.pop %v117
    %v120 = vrcp.pop %v118
    %v121 = vmul.f32 %v83, %v119
    %v122 = vmul.f32 %v84, %v120
    %v123 = vpack.c.bf16 %v122, %v121
    %v124 = vld [vmem:[#allocation5] sm:$0xf]
    %v125 = vld [vmem:[#allocation5 + $0x4] sm:$0xf]
    %v126 = vld [vmem:[#allocation5 + $0x8] sm:$0xf]
    %v127 = vld [vmem:[#allocation5 + $0xc] sm:$0xf]
    %v128 = vld [vmem:[#allocation5 + $0x10] sm:$0xf]
    %v129 = vld [vmem:[#allocation5 + $0x14] sm:$0xf]
    %v130 = vld [vmem:[#allocation5 + $0x18] sm:$0xf]
    %v131 = vld [vmem:[#allocation5 + $0x1c] sm:$0xf]
    %v132 = vld [vmem:[#allocation5 + $0x20] sm:$0xf]
    %v133 = vld [vmem:[#allocation5 + $0x24] sm:$0xf]
    %v134 = vld [vmem:[#allocation5 + $0x28] sm:$0xf]
    %v135 = vld [vmem:[#allocation5 + $0x2c] sm:$0xf]
    %v136 = vld [vmem:[#allocation5 + $0x30] sm:$0xf]
    %v137 = vld [vmem:[#allocation5 + $0x34] sm:$0xf]
    %v138 = vld [vmem:[#allocation5 + $0x38] sm:$0xf]
    %v139 = vld [vmem:[#allocation5 + $0x3c] sm:$0xf]
    %v156 = vunpack.c.l.b16 %v124
    %v157 = vunpack.c.l.b16 %v125
    %v158 = vunpack.c.l.b16 %v126
    %v159 = vunpack.c.l.b16 %v127
    %v160 = vunpack.c.l.b16 %v128
    %v161 = vunpack.c.l.b16 %v129
    %v162 = vunpack.c.l.b16 %v130
    %v163 = vunpack.c.l.b16 %v131
    %v164 = vunpack.c.l.b16 %v132
    %v165 = vunpack.c.l.b16 %v133
    %v166 = vunpack.c.l.b16 %v134
    %v167 = vunpack.c.l.b16 %v135
    %v168 = vunpack.c.l.b16 %v136
    %v169 = vunpack.c.l.b16 %v137
    %v170 = vunpack.c.l.b16 %v138
    %v171 = vunpack.c.l.b16 %v139
    %v172 = vpack.c.b16 %v157, %v156
    %v173 = vpack.c.b16 %v159, %v158
    %v174 = vpack.c.b16 %v161, %v160
    %v175 = vpack.c.b16 %v163, %v162
    %v176 = vpack.c.b16 %v165, %v164
    %v177 = vpack.c.b16 %v167, %v166
    %v178 = vpack.c.b16 %v169, %v168
    %v179 = vpack.c.b16 %v171, %v170
    %188 = vmatpush.bf16.msra.mxu0 %v179
    %189 = vmatpush.bf16.msra.mxu0 %v178
    %190 = vmatpush.bf16.msra.mxu0 %v177
    %191 = vmatpush.bf16.msra.mxu0 %v176
    %192 = vmatpush.bf16.msra.mxu0 %v175
    %193 = vmatpush.bf16.msra.mxu0 %v174
    %194 = vmatpush.bf16.msra.mxu0 %v173
    %195 = vmatpush.bf16.msra.mxu0 %v172
    %196 = vmatmul.bf16.gmra.mxu0 %v123
    %v197 = vpop.f32.mrf.mxu0
    %v198 = vadd.f32 0.0, %v197
    %v199 = vpop.f32.mrf.mxu0
    %v200 = vadd.f32 0.0, %v199
    %201 = vdwg.mxu0
    %v202 = vadd.f32 %v68, %v198
    %v203 = vadd.f32 %v69, %v200
    %v204 = vld [vmem:[#allocation7] sm:$0x1]
    %v205 = vperm.slane %v204, 0
    %v206 = vadd.f32 %v202, %v205
    %v207 = vadd.f32 %v203, %v205
    %208 = vadd.xlane.f32.xlu0 %v206
    %v209 = vpop.xlane.xlu0 %208
    %210 = vadd.xlane.f32.xlu0 %v207
    %v211 = vpop.xlane.xlu0 %210
    %v212 = vmul.f32 %v209, %v80
    %v213 = vmul.f32 %v211, %v80
    %v214 = vsub.f32 %v206, %v212
    %v215 = vsub.f32 %v207, %v213
    %v216 = vmul.f32 %v214, %v214
    %v217 = vmul.f32 %v215, %v215
    %218 = vadd.xlane.f32.xlu0 %v216
    %v219 = vpop.xlane.xlu0 %218
    %220 = vadd.xlane.f32.xlu0 %v217
    %v221 = vpop.xlane.xlu0 %220
    %v222 = vmul.f32 %v219, 0.007874016
    %v223 = vmul.f32 %v221, 0.007874016
    %v224 = vrsqrt.pop %v222
    %v225 = vmul.f32 %v224, %v222
    %v226 = vmul.f32 %v225, %v224
    %v227 = vmul.f32 0.5, %v226
    %v228 = vsub.f32 1.5, %v227
    %v229 = vmul.f32 %v224, %v228
    %v230 = vmul.f32 %v222, %v229
    %vm231 = vcmp.eq.f32.partialorder %v222, inf
    %v232 = vsel %vm231, %v222, %v230
    %vm233 = vcmp.eq.f32.partialorder %v222, 0.0
    %v234 = vand.u32 %v222, 2147483648
    %v235 = vsel %vm233, %v234, %v232
    %v236 = vrsqrt.pop %v223
    %v237 = vmul.f32 %v236, %v223
    %v238 = vmul.f32 %v237, %v236
    %v239 = vmul.f32 0.5, %v238
    %v240 = vsub.f32 1.5, %v239
    %v241 = vmul.f32 %v236, %v240
    %v242 = vmul.f32 %v223, %v241
    %vm243 = vcmp.eq.f32.partialorder %v223, inf
    %v244 = vsel %vm243, %v223, %v242
    %vm245 = vcmp.eq.f32.partialorder %v223, 0.0
    %v246 = vand.u32 %v223, 2147483648
    %v247 = vsel %vm245, %v246, %v244
    %v248 = vadd.f32 %v235, 1e-06
    %v249 = vadd.f32 %v247, 1e-06
    %v250 = vrcp.pop %v248
    %v251 = vrcp.pop %v249
    %v252 = vmul.f32 %v214, %v250
    %v253 = vmul.f32 %v215, %v251
    %v254 = vpack.c.bf16 %v253, %v252
    %s255 = scalar_lea.vmem [#allocation5], 64
    %v256 = vld [vmem:[%s255] sm:$0xf]
    %v257 = vld [vmem:[%s255 + $0x4] sm:$0xf]
    %v258 = vld [vmem:[%s255 + $0x8] sm:$0xf]
    %v259 = vld [vmem:[%s255 + $0xc] sm:$0xf]
    %v260 = vld [vmem:[%s255 + $0x10] sm:$0xf]
    %v261 = vld [vmem:[%s255 + $0x14] sm:$0xf]
    %v262 = vld [vmem:[%s255 + $0x18] sm:$0xf]
    %v263 = vld [vmem:[%s255 + $0x1c] sm:$0xf]
    %v264 = vld [vmem:[%s255 + $0x20] sm:$0xf]
    %v265 = vld [vmem:[%s255 + $0x24] sm:$0xf]
    %v266 = vld [vmem:[%s255 + $0x28] sm:$0xf]
    %v267 = vld [vmem:[%s255 + $0x2c] sm:$0xf]
    %v268 = vld [vmem:[%s255 + $0x30] sm:$0xf]
    %v269 = vld [vmem:[%s255 + $0x34] sm:$0xf]
    %v270 = vld [vmem:[%s255 + $0x38] sm:$0xf]
    %v271 = vld [vmem:[%s255 + $0x3c] sm:$0xf]
    %v288 = vunpack.c.l.b16 %v256
    %v289 = vunpack.c.l.b16 %v257
    %v290 = vunpack.c.l.b16 %v258
    %v291 = vunpack.c.l.b16 %v259
    %v292 = vunpack.c.l.b16 %v260
    %v293 = vunpack.c.l.b16 %v261
    %v294 = vunpack.c.l.b16 %v262
    %v295 = vunpack.c.l.b16 %v263
    %v296 = vunpack.c.l.b16 %v264
    %v297 = vunpack.c.l.b16 %v265
    %v298 = vunpack.c.l.b16 %v266
    %v299 = vunpack.c.l.b16 %v267
    %v300 = vunpack.c.l.b16 %v268
    %v301 = vunpack.c.l.b16 %v269
    %v302 = vunpack.c.l.b16 %v270
    %v303 = vunpack.c.l.b16 %v271
    %v304 = vpack.c.b16 %v289, %v288
    %v305 = vpack.c.b16 %v291, %v290
    %v306 = vpack.c.b16 %v293, %v292
    %v307 = vpack.c.b16 %v295, %v294
    %v308 = vpack.c.b16 %v297, %v296
    %v309 = vpack.c.b16 %v299, %v298
    %v310 = vpack.c.b16 %v301, %v300
    %v311 = vpack.c.b16 %v303, %v302
    %320 = vmatpush.bf16.msra.mxu0 %v311
    %321 = vmatpush.bf16.msra.mxu0 %v310
    %322 = vmatpush.bf16.msra.mxu0 %v309
    %323 = vmatpush.bf16.msra.mxu0 %v308
    %324 = vmatpush.bf16.msra.mxu0 %v307
    %325 = vmatpush.bf16.msra.mxu0 %v306
    %326 = vmatpush.bf16.msra.mxu0 %v305
    %327 = vmatpush.bf16.msra.mxu0 %v304
    %328 = vmatmul.bf16.gmra.mxu0 %v254
    %v329 = vpop.f32.mrf.mxu0
    %v330 = vadd.f32 0.0, %v329
    %v331 = vpop.f32.mrf.mxu0
    %v332 = vadd.f32 0.0, %v331
    %333 = vdwg.mxu0
    %v334 = vadd.f32 %v206, %v330
    %v335 = vadd.f32 %v207, %v332
    %v336 = vld [vmem:[#allocation7 + $0x1] sm:$0x1]
    %v337 = vperm.slane %v336, 0
    %v338 = vadd.f32 %v334, %v337
    %v339 = vadd.f32 %v335, %v337
    %340 = vadd.xlane.f32.xlu0 %v338
    %v341 = vpop.xlane.xlu0 %340
    %342 = vadd.xlane.f32.xlu0 %v339
    %v343 = vpop.xlane.xlu0 %342
    %v344 = vmul.f32 %v341, %v80
    %v345 = vmul.f32 %v343, %v80
    %v346 = vsub.f32 %v338, %v344
    %v347 = vsub.f32 %v339, %v345
    %v348 = vmul.f32 %v346, %v346
    %v349 = vmul.f32 %v347, %v347
    %350 = vadd.xlane.f32.xlu0 %v348
    %v351 = vpop.xlane.xlu0 %350
    %352 = vadd.xlane.f32.xlu0 %v349
    %v353 = vpop.xlane.xlu0 %352
    %v354 = vmul.f32 %v351, 0.007874016
    %v355 = vmul.f32 %v353, 0.007874016
    %v356 = vrsqrt.pop %v354
    %v357 = vmul.f32 %v356, %v354
    %v358 = vmul.f32 %v357, %v356
    %v359 = vmul.f32 0.5, %v358
    %v360 = vsub.f32 1.5, %v359
    %v361 = vmul.f32 %v356, %v360
    %v362 = vmul.f32 %v354, %v361
    %vm363 = vcmp.eq.f32.partialorder %v354, inf
    %v364 = vsel %vm363, %v354, %v362
    %vm365 = vcmp.eq.f32.partialorder %v354, 0.0
    %v366 = vand.u32 %v354, 2147483648
    %v367 = vsel %vm365, %v366, %v364
    %v368 = vrsqrt.pop %v355
    %v369 = vmul.f32 %v368, %v355
    %v370 = vmul.f32 %v369, %v368
    %v371 = vmul.f32 0.5, %v370
    %v372 = vsub.f32 1.5, %v371
    %v373 = vmul.f32 %v368, %v372
    %v374 = vmul.f32 %v355, %v373
    %vm375 = vcmp.eq.f32.partialorder %v355, inf
    %v376 = vsel %vm375, %v355, %v374
    %vm377 = vcmp.eq.f32.partialorder %v355, 0.0
    %v378 = vand.u32 %v355, 2147483648
    %v379 = vsel %vm377, %v378, %v376
    %v380 = vadd.f32 %v367, 1e-06
    %v381 = vadd.f32 %v379, 1e-06
    %v382 = vrcp.pop %v380
    %v383 = vmul.f32 %v380, %v382
    %v384 = vsub.f32 1.0, %v383
    %v385 = vmul.f32 %v382, %v384
    %v386 = vadd.f32 %v382, %v385
    %vm387 = vweird.f32 %v380
    %vm388 = vweird.f32 %v382
    %vm389 = vmor %vm387, %vm388
    %v390 = vsel %vm389, %v382, %v386
    %v391 = vand.u32 2147483647, %v380
    %vm392 = vcmp.eq.f32.partialorder %v391, 8.507059e+37
    %v393 = vand.u32 %v380, 2147483648
    %v394 = vor.u32 1.1754944e-38, %v393
    %v395 = vsel %vm392, %v394, %v390
    %v396 = vmul.f32 1.0, %v395
    %v397 = vrcp.pop %v381
    %v398 = vmul.f32 %v381, %v397
    %v399 = vsub.f32 1.0, %v398
    %v400 = vmul.f32 %v397, %v399
    %v401 = vadd.f32 %v397, %v400
    %vm402 = vweird.f32 %v381
    %vm403 = vweird.f32 %v397
    %vm404 = vmor %vm402, %vm403
    %v405 = vsel %vm404, %v397, %v401
    %v406 = vand.u32 2147483647, %v381
    %vm407 = vcmp.eq.f32.partialorder %v406, 8.507059e+37
    %v408 = vand.u32 %v381, 2147483648
    %v409 = vor.u32 1.1754944e-38, %v408
    %v410 = vsel %vm407, %v409, %v405
    %v411 = vmul.f32 1.0, %v410
    %v412 = vld [vmem:[%s3] sm:$0x1]
    %v413 = vmul.f32 %v346, %v396
    %v414 = vmul.f32 %v347, %v411
    %v416 = vperm.slane %v412, 0
    %v418 = vmul.f32 %v416, %v413
    %v419 = vmul.f32 %v416, %v414
    %v420 = vld [vmem:[%s4] sm:$0x1]
    %v422 = vperm.slane %v420, 0
    %v424 = vadd.f32 %v418, %v422
    %v425 = vadd.f32 %v419, %v422
    %v426 = vpack.c.bf16 %v424, %v424
    %v427 = vpack.c.bf16 %v425, %v425
    %428 = vst [vmem:[#allocation8] sm:$0xf] %v426
    %429 = vst [vmem:[#allocation8 + $0x4] sm:$0xf] %v427
    // Predicated region
    $region34: #{tpu_custom_call.1} parent=1 // pred_check
      _
    $region35: #{tpu_custom_call.1} parent=1 // pred_check_branch
      %431 = sbr.rel (0) target = $region37
    $region36: #{tpu_custom_call.1} parent=1 // pred_region
      %433 = vsyncadd [#allocation4], 0
      %s434 = sshll.u32 [#allocation8], 4
      %s435 = int_to_ptr.vmem [resolvable:$true] %s434
      %s436 = sshll.u32 %s5, 4
      %s437 = int_to_ptr.hbm [resolvable:$true] %s436
      %442 = dma.vmem_to_hbm [thread:$0]  %s435, 128, %s437, [#allocation4], 64, 64, 4
    $region37: #{tpu_custom_call.1} parent=1 // pred_fallthru
      _
    // Predicated region
    $region38: #{tpu_custom_call.1} parent=1 // pred_check
      _
    $region39: #{tpu_custom_call.1} parent=1 // pred_check_branch
      %444 = sbr.rel (0) target = $region41
    $region40: #{tpu_custom_call.1} parent=1 // pred_region
      %446 = dma.done [#allocation4], 128
    $region41: #{tpu_custom_call.1} parent=1 // pred_fallthru
      _
    %447 = vsyncpa [#allocation3], 1
    %448 = vsyncpa [#allocation6], 1
    %449 = vsyncpa [#allocation4], 1

</llo_original>
